<compile_context>
chip_gen: v7x
topology: tpu7x:2x2x1
jax: 0.10.0
libtpu: 0.0.40
codegen_flags: <defaults>
</compile_context>

<pallas_src>
import functools

import jax
import jax.numpy as jnp
from jax.experimental import pallas as pl
from jax.experimental.pallas import tpu as pltpu


def _focal_kernel(p_ref, o_ref, *, W, H):
    # p_ref: SMEM f32[2] -> [fx, fy]; o_ref: SMEM f32[2].
    # W, H are Python floats folded at trace time -> pure scalar-ALU path.
    fx = p_ref[0]
    fy = p_ref[1]
    o_ref[0] = fx * fx * W
    o_ref[1] = fy * fy * H


def make_learn_focal_forward(H, W):
    """Build a jitted forward: params f32[2] = [fx, fy] -> f32[2]."""
    kernel = functools.partial(_focal_kernel, W=float(W), H=float(H))

    call = pl.pallas_call(
        kernel,
        out_shape=jax.ShapeDtypeStruct((2,), jnp.float32),
        in_specs=[pl.BlockSpec(memory_space=pltpu.SMEM)],
        out_specs=pl.BlockSpec(memory_space=pltpu.SMEM),
        cost_estimate=pl.CostEstimate(flops=4, transcendentals=0,
                                      bytes_accessed=32),
    )

    @jax.jit
    def forward(params):
        return call(params)

    return forward


if __name__ == "__main__":
    # H != W so a W/H swap bug in the kernel would be caught by the assert.
    H, W = 756, 1008

    # Deterministic parameter init: nn.Parameter(torch.tensor(1.0)) twice ->
    # fx = fy = 1.0; add a small deterministic perturbation from PRNGKey(0)
    # so the squaring is actually exercised.
    key = jax.random.PRNGKey(0)
    perturb = 0.1 * jax.random.normal(key, (2,), dtype=jnp.float32)
    params = jnp.ones((2,), dtype=jnp.float32) + perturb          # [fx, fy]

    forward = make_learn_focal_forward(H, W)
    fxfy = forward(params)
    fxfy = jax.block_until_ready(fxfy)

    # Reference check in plain JAX.
    ref = jnp.stack([params[0] ** 2 * W, params[1] ** 2 * H])
    assert fxfy.shape == (2,) and fxfy.dtype == jnp.float32
    assert jnp.allclose(fxfy, ref, rtol=1e-6, atol=1e-6)

    print("KERNEL_OK")
</pallas_src>

<mosaic_0001>
module attributes {stable_mosaic.version = 11 : i64} {
  func.func @_focal_kernel(%arg0: memref<2xf32, #tpu.memory_space<smem>>, %arg1: memref<2xf32, #tpu.memory_space<smem>>) attributes {dimension_semantics = [], scalar_prefetch = 0 : i64, scratch_operands = 0 : i64, tpu.core_type = #tpu.core_type<tc>} {
    %c0 = arith.constant 0 : index
    %0 = memref.load %arg0[%c0] : memref<2xf32, #tpu.memory_space<smem>>
    %c1 = arith.constant 1 : index
    %1 = memref.load %arg0[%c1] : memref<2xf32, #tpu.memory_space<smem>>
    %2 = arith.mulf %0, %0 : f32
    %cst = arith.constant 1.008000e+03 : f32
    %3 = arith.mulf %2, %cst : f32
    %c0_0 = arith.constant 0 : index
    %4 = memref.load %arg1[%c0_0] : memref<2xf32, #tpu.memory_space<smem>>
    memref.store %3, %arg1[%c0_0] : memref<2xf32, #tpu.memory_space<smem>>
    %5 = arith.mulf %1, %1 : f32
    %cst_1 = arith.constant 7.560000e+02 : f32
    %6 = arith.mulf %5, %cst_1 : f32
    %c1_2 = arith.constant 1 : index
    %7 = memref.load %arg1[%c1_2] : memref<2xf32, #tpu.memory_space<smem>>
    memref.store %6, %arg1[%c1_2] : memref<2xf32, #tpu.memory_space<smem>>
    return
  }
}

</mosaic_0001>

<llo_original>
// kernel: forward.1
$region0: #{forward.1}
  #allocation0 [shape = 'u32[]', space=smem, size = 0x4, offset = 0x4, fixed_abs, tag = 'smem constant byte address 0x4 - core index']
  #allocation1 [shape = 'u32[144,128]{1,0:T(1,128)}', space=vmem, size = 0x12000, scoped, tag = 'internal scratch']
  %s0 = inlined_call_operand.hbm [shape: f32[2], index: 0, kind: input, shape index: {}]
  %s1 = inlined_call_operand.hbm [shape: f32[2], index: 1, kind: output, shape index: {}]
  %s2 = sld [smem:[#allocation0]]
  $region18: #{forward.1} parent=0
    _
  %s4 = ssub.s32 1, %s2
  %s5 = scalar_select 0, %s4, %s2
  $region1: #{forward.1} parent=0
    #allocation2 [shape = 'u8[512]{0}', space=smem, size = 0x200, scoped, tag = 'input window, operand 0, single buffered']
    #allocation3 [shape = 's32[1]{0}', space=sflag, size = 0x4, scoped, tag = 'scoped memory for forward.1']
    #allocation4 [shape = 's32[1]{0}', space=sflag, size = 0x4, scoped, tag = 'scoped memory for forward.1']
    #allocation5 [shape = 'u8[512]{0}', space=smem, size = 0x200, scoped, tag = 'output window, operand 0, single buffered']
    %6 = vsyncpa [#allocation3], 0
    %7 = vsyncpa [#allocation4], 0
    // Predicated region
    $region2: #{forward.1} parent=1 // pred_check
      _
    $region3: #{forward.1} parent=1 // pred_check_branch
      %9 = sbr.rel (0) target = $region5
    $region4: #{forward.1} parent=1 // pred_region
      %s11 = ssub.s32 16, 16
      %12 = vsyncadd [#allocation3], %s11
      %15 = dma.hbm_to_smem %s0, 16, [#allocation2], [#allocation3]
    $region5: #{forward.1} parent=1 // pred_fallthru
      _
    // Predicated region
    $region6: #{forward.1} parent=1 // pred_check
      _
    $region7: #{forward.1} parent=1 // pred_check_branch
      %17 = sbr.rel (0) target = $region9
    $region8: #{forward.1} parent=1 // pred_region
      %18 = dma.done [#allocation3], 16
    $region9: #{forward.1} parent=1 // pred_fallthru
      _
    %19 = sfence
    %s20 = sld [smem:[#allocation2]]
    %s21 = sld [smem:[#allocation2 + $0x1]]
    %s22 = smul.f32 %s20, %s20
    %s23 = smul.f32 %s22, 1008.0
    %s24 = scalar_lea.smem [#allocation5], 0
    %25 = sst [smem:[%s24]] %s23
    %s26 = smul.f32 %s21, %s21
    %s27 = smul.f32 %s26, 756.0
    %s28 = scalar_lea.smem [#allocation5], 1
    %29 = sst [smem:[%s28]] %s27
    // Predicated region
    $region10: #{forward.1} parent=1 // pred_check
      _
    $region11: #{forward.1} parent=1 // pred_check_branch
      %31 = sbr.rel (0) target = $region13
    $region12: #{forward.1} parent=1 // pred_region
      %s33 = ssub.s32 16, 16
      %34 = vsyncadd [#allocation4], %s33
      %37 = dma.smem_to_hbm [#allocation5], 16, %s1, [#allocation4]
    $region13: #{forward.1} parent=1 // pred_fallthru
      _
    // Predicated region
    $region14: #{forward.1} parent=1 // pred_check
      _
    $region15: #{forward.1} parent=1 // pred_check_branch
      %39 = sbr.rel (0) target = $region17
    $region16: #{forward.1} parent=1 // pred_region
      %40 = dma.done [#allocation4], 16
    $region17: #{forward.1} parent=1 // pred_fallthru
      _
    %41 = sfence
    %42 = vsyncpa [#allocation3], 1
    %43 = vsyncpa [#allocation4], 1

</llo_original>
